<compile_context>
chip_gen: v7x
topology: tpu7x:2x2x1
jax: 0.10.0
libtpu: 0.0.40
codegen_flags: <defaults>
</compile_context>

<pallas_src>
import jax
import jax.numpy as jnp
from jax import lax
from jax.experimental import pallas as pl
from jax.experimental.pallas import tpu as pltpu

IN_FEATURES = 2048
OUT_FEATURES = 50


def linear_kernel(x_ref, w_ref, b_ref, o_ref):
    """Single-step fused linear: y = x @ W.T + b.

    x_ref : (B, K)  input               (lane dim = K, dense)
    w_ref : (N, K)  weight, torch layout (lane dim = K, dense)
    b_ref : (1, N)  bias
    o_ref : (B, N)  output
    """
    y = lax.dot_general(
        x_ref[...],
        w_ref[...],
        dimension_numbers=(((1,), (1,)), ((), ())),  # contract K with K
        preferred_element_type=jnp.float32,
    )
    o_ref[...] = (y + b_ref[...]).astype(o_ref.dtype)


def net_forward(x, weight, bias):
    """Pallas implementation of Net.forward: fc = nn.Linear(2048, 50).

    x      : (B, 2048) f32
    weight : (50, 2048) f32  (native torch nn.Linear layout, NOT transposed)
    bias   : (1, 50)   f32
    """
    B, K = x.shape
    N, Kw = weight.shape
    assert K == Kw
    assert bias.shape == (1, N)

    itemsize = jnp.dtype(x.dtype).itemsize
    cost = pl.CostEstimate(
        flops=2 * B * K * N,
        transcendentals=0,
        bytes_accessed=(B * K + N * K + N + B * N) * itemsize,
    )

    return pl.pallas_call(
        linear_kernel,
        out_shape=jax.ShapeDtypeStruct((B, N), x.dtype),
        in_specs=[
            pl.BlockSpec(memory_space=pltpu.MemorySpace.VMEM),  # x   (full)
            pl.BlockSpec(memory_space=pltpu.MemorySpace.VMEM),  # W   (full)
            pl.BlockSpec(memory_space=pltpu.MemorySpace.VMEM),  # bias(full)
        ],
        out_specs=pl.BlockSpec(memory_space=pltpu.MemorySpace.VMEM),
        cost_estimate=cost,
    )(x, weight, bias)


if __name__ == "__main__":
    key = jax.random.PRNGKey(0)
    kx, kw, kb = jax.random.split(key, 3)

    B = 8  # small batch

    # Deterministic parameter init mimicking nn.Linear default:
    # U(-1/sqrt(in_features), 1/sqrt(in_features))
    bound = 1.0 / jnp.sqrt(jnp.float32(IN_FEATURES))
    weight = jax.random.uniform(
        kw, (OUT_FEATURES, IN_FEATURES), jnp.float32, -bound, bound
    )
    bias = jax.random.uniform(
        kb, (1, OUT_FEATURES), jnp.float32, -bound, bound
    )
    x = jax.random.normal(kx, (B, IN_FEATURES), jnp.float32)

    out = net_forward(x, weight, bias)
    out = jax.block_until_ready(out)

    # Correctness check against plain-JAX reference of torch semantics.
    ref = x @ weight.T + bias
    assert out.shape == (B, OUT_FEATURES)
    assert jnp.allclose(out, ref, atol=1e-4, rtol=1e-4)

    print("KERNEL_OK")
</pallas_src>

<mosaic_0001>
module attributes {stable_mosaic.version = 11 : i64} {
  func.func @linear_kernel(%arg0: memref<8x2048xf32, #tpu.memory_space<vmem>>, %arg1: memref<50x2048xf32, #tpu.memory_space<vmem>>, %arg2: memref<1x50xf32, #tpu.memory_space<vmem>>, %arg3: memref<8x50xf32, #tpu.memory_space<vmem>>) attributes {dimension_semantics = [], scalar_prefetch = 0 : i64, scratch_operands = 0 : i64, tpu.core_type = #tpu.core_type<tc>} {
    %c0 = arith.constant 0 : index
    %c0_0 = arith.constant 0 : index
    %0 = vector.load %arg0[%c0, %c0_0] : memref<8x2048xf32, #tpu.memory_space<vmem>>, vector<8x2048xf32>
    %c0_1 = arith.constant 0 : index
    %c0_2 = arith.constant 0 : index
    %1 = vector.load %arg1[%c0_1, %c0_2] : memref<50x2048xf32, #tpu.memory_space<vmem>>, vector<50x2048xf32>
    %cst = arith.constant dense<0.000000e+00> : vector<8x50xf32>
    %2 = tpu.matmul %0, %1, %cst {dimension_numbers = #tpu.dot_dimension_numbers<[1], [1], [0], [0], [0, 0, 1, 0], [], []>} : vector<8x2048xf32>, vector<50x2048xf32>, vector<8x50xf32> -> vector<8x50xf32>
    %c0_3 = arith.constant 0 : index
    %c0_4 = arith.constant 0 : index
    %3 = vector.load %arg2[%c0_3, %c0_4] : memref<1x50xf32, #tpu.memory_space<vmem>>, vector<1x50xf32>
    %4 = vector.broadcast %3 : vector<1x50xf32> to vector<8x50xf32>
    %5 = arith.addf %2, %4 : vector<8x50xf32>
    %c0_5 = arith.constant 0 : index
    %c0_6 = arith.constant 0 : index
    %6 = vector.load %arg3[%c0_5, %c0_6] : memref<8x50xf32, #tpu.memory_space<vmem>>, vector<8x50xf32>
    tpu.vector_store %arg3[%c0_5, %c0_6], %5 {strides = array<i32>} : memref<8x50xf32, #tpu.memory_space<vmem>>, vector<8x50xf32>,
    return
  }
}

</mosaic_0001>

<llo_original>
// kernel: tpu_custom_call.1
$region0: #{tpu_custom_call.1}
  #allocation0 [shape = 'u32[]', space=smem, size = 0x4, offset = 0x4, fixed_abs, tag = 'smem constant byte address 0x4 - core index']
  #allocation1 [shape = 'u32[144,128]{1,0:T(1,128)}', space=vmem, size = 0x12000, scoped, tag = 'internal scratch']
  %s0 = inlined_call_operand.hbm [shape: f32[8,2048], index: 0, kind: input, shape index: {}]
  %s1 = inlined_call_operand.hbm [shape: f32[50,2048], index: 1, kind: input, shape index: {}]
  %s2 = inlined_call_operand.vmem [shape: f32[1,50], index: 2, kind: input, shape index: {}]
  %s3 = inlined_call_operand.hbm [shape: f32[8,50], index: 3, kind: output, shape index: {}]
  %s4 = sld [smem:[#allocation0]]
  $region30: #{tpu_custom_call.1} parent=0
    _
  %s6 = ssub.s32 1, %s4
  %s7 = scalar_select 0, %s6, %s4
  $region1: #{tpu_custom_call.1} parent=0
    #allocation2 [shape = 'u8[65536]{0}', space=vmem, size = 0x10000, scoped, tag = 'input window, operand 0, single buffered']
    #allocation3 [shape = 's32[1]{0}', space=sflag, size = 0x4, scoped, tag = 'scoped memory for tpu_custom_call.1']
    #allocation4 [shape = 's32[1]{0}', space=sflag, size = 0x4, scoped, tag = 'scoped memory for tpu_custom_call.1']
    #allocation5 [shape = 'u8[458752]{0}', space=vmem, size = 0x70000, scoped, tag = 'input window, operand 1, single buffered']
    #allocation6 [shape = 's32[1]{0}', space=sflag, size = 0x4, scoped, tag = 'scoped memory for tpu_custom_call.1']
    #allocation7 [shape = 'u8[4096]{0}', space=vmem, size = 0x1000, scoped, tag = 'output window, operand 0, single buffered']
    %8 = vsyncpa [#allocation3], 0
    %9 = vsyncpa [#allocation6], 0
    %10 = vsyncpa [#allocation4], 0
    // Predicated region
    $region2: #{tpu_custom_call.1} parent=1 // pred_check
      _
    $region3: #{tpu_custom_call.1} parent=1 // pred_check_branch
      %12 = sbr.rel (0) target = $region5
    $region4: #{tpu_custom_call.1} parent=1 // pred_region
      %s14 = ssub.s32 2048, 2048
      %15 = vsyncadd [#allocation3], %s14
      %s17 = sshll.u32 [#allocation2], 4
      %s18 = int_to_ptr.vmem [resolvable:$true] %s17
      %20 = dma.hbm_to_vmem [thread:$0]  %s0, 2048, %s18, [#allocation3]
    $region5: #{tpu_custom_call.1} parent=1 // pred_fallthru
      _
    // Predicated region
    $region6: #{tpu_custom_call.1} parent=1 // pred_check
      _
    $region7: #{tpu_custom_call.1} parent=1 // pred_check_branch
      %22 = sbr.rel (0) target = $region9
    $region8: #{tpu_custom_call.1} parent=1 // pred_region
      %s24 = ssub.s32 14336, 14336
      %25 = vsyncadd [#allocation6], %s24
      %s26 = sshll.u32 [#allocation5], 4
      %s27 = int_to_ptr.vmem [resolvable:$true] %s26
      %32 = dma.hbm_to_vmem [thread:$0]  %s1, 14336, %s27, [#allocation6], 2048, 2048, 128
    $region9: #{tpu_custom_call.1} parent=1 // pred_fallthru
      _
    // Predicated region
    $region10: #{tpu_custom_call.1} parent=1 // pred_check
      _
    $region11: #{tpu_custom_call.1} parent=1 // pred_check_branch
      %34 = sbr.rel (0) target = $region13
    $region12: #{tpu_custom_call.1} parent=1 // pred_region
      _
    $region13: #{tpu_custom_call.1} parent=1 // pred_fallthru
      _
    // Predicated region
    $region14: #{tpu_custom_call.1} parent=1 // pred_check
      _
    $region15: #{tpu_custom_call.1} parent=1 // pred_check_branch
      %36 = sbr.rel (0) target = $region17
    $region16: #{tpu_custom_call.1} parent=1 // pred_region
      %37 = dma.done [#allocation3], 2048
    $region17: #{tpu_custom_call.1} parent=1 // pred_fallthru
      _
    // Predicated region
    $region18: #{tpu_custom_call.1} parent=1 // pred_check
      _
    $region19: #{tpu_custom_call.1} parent=1 // pred_check_branch
      %39 = sbr.rel (0) target = $region21
    $region20: #{tpu_custom_call.1} parent=1 // pred_region
      %40 = dma.done [#allocation6], 14336
    $region21: #{tpu_custom_call.1} parent=1 // pred_fallthru
      _
    %v41 = vld [vmem:[#allocation2] sm:$0xff]
    %v42 = vld [vmem:[#allocation2 + $0x8] sm:$0xff]
    %v43 = vld [vmem:[#allocation2 + $0x10] sm:$0xff]
    %v44 = vld [vmem:[#allocation2 + $0x18] sm:$0xff]
    %v45 = vld [vmem:[#allocation2 + $0x20] sm:$0xff]
    %v46 = vld [vmem:[#allocation2 + $0x28] sm:$0xff]
    %v47 = vld [vmem:[#allocation2 + $0x30] sm:$0xff]
    %v48 = vld [vmem:[#allocation2 + $0x38] sm:$0xff]
    %v49 = vld [vmem:[#allocation2 + $0x40] sm:$0xff]
    %v50 = vld [vmem:[#allocation2 + $0x48] sm:$0xff]
    %v51 = vld [vmem:[#allocation2 + $0x50] sm:$0xff]
    %v52 = vld [vmem:[#allocation2 + $0x58] sm:$0xff]
    %v53 = vld [vmem:[#allocation2 + $0x60] sm:$0xff]
    %v54 = vld [vmem:[#allocation2 + $0x68] sm:$0xff]
    %v55 = vld [vmem:[#allocation2 + $0x70] sm:$0xff]
    %v56 = vld [vmem:[#allocation2 + $0x78] sm:$0xff]
    %v57 = vld [vmem:[#allocation5] sm:$0xff]
    %v58 = vld [vmem:[#allocation5 + $0x8] sm:$0xff]
    %v59 = vld [vmem:[#allocation5 + $0x10] sm:$0xff]
    %v60 = vld [vmem:[#allocation5 + $0x18] sm:$0xff]
    %v61 = vld [vmem:[#allocation5 + $0x20] sm:$0xff]
    %v62 = vld [vmem:[#allocation5 + $0x28] sm:$0xff]
    %v63 = vld [vmem:[#allocation5 + $0x30] sm:$0xff]
    %v64 = vld [vmem:[#allocation5 + $0x38] sm:$0xff]
    %v65 = vld [vmem:[#allocation5 + $0x40] sm:$0xff]
    %v66 = vld [vmem:[#allocation5 + $0x48] sm:$0xff]
    %v67 = vld [vmem:[#allocation5 + $0x50] sm:$0xff]
    %v68 = vld [vmem:[#allocation5 + $0x58] sm:$0xff]
    %v69 = vld [vmem:[#allocation5 + $0x60] sm:$0xff]
    %v70 = vld [vmem:[#allocation5 + $0x68] sm:$0xff]
    %v71 = vld [vmem:[#allocation5 + $0x70] sm:$0xff]
    %v72 = vld [vmem:[#allocation5 + $0x78] sm:$0xff]
    %v73 = vld [vmem:[#allocation5 + $0x80] sm:$0xff]
    %v74 = vld [vmem:[#allocation5 + $0x88] sm:$0xff]
    %v75 = vld [vmem:[#allocation5 + $0x90] sm:$0xff]
    %v76 = vld [vmem:[#allocation5 + $0x98] sm:$0xff]
    %v77 = vld [vmem:[#allocation5 + $0xa0] sm:$0xff]
    %v78 = vld [vmem:[#allocation5 + $0xa8] sm:$0xff]
    %v79 = vld [vmem:[#allocation5 + $0xb0] sm:$0xff]
    %v80 = vld [vmem:[#allocation5 + $0xb8] sm:$0xff]
    %v81 = vld [vmem:[#allocation5 + $0xc0] sm:$0xff]
    %v82 = vld [vmem:[#allocation5 + $0xc8] sm:$0xff]
    %v83 = vld [vmem:[#allocation5 + $0xd0] sm:$0xff]
    %v84 = vld [vmem:[#allocation5 + $0xd8] sm:$0xff]
    %v85 = vld [vmem:[#allocation5 + $0xe0] sm:$0xff]
    %v86 = vld [vmem:[#allocation5 + $0xe8] sm:$0xff]
    %v87 = vld [vmem:[#allocation5 + $0xf0] sm:$0xff]
    %v88 = vld [vmem:[#allocation5 + $0xf8] sm:$0xff]
    %v89 = vld [vmem:[#allocation5 + $0x100] sm:$0xff]
    %v90 = vld [vmem:[#allocation5 + $0x108] sm:$0xff]
    %v91 = vld [vmem:[#allocation5 + $0x110] sm:$0xff]
    %v92 = vld [vmem:[#allocation5 + $0x118] sm:$0xff]
    %v93 = vld [vmem:[#allocation5 + $0x120] sm:$0xff]
    %v94 = vld [vmem:[#allocation5 + $0x128] sm:$0xff]
    %v95 = vld [vmem:[#allocation5 + $0x130] sm:$0xff]
    %v96 = vld [vmem:[#allocation5 + $0x138] sm:$0xff]
    %v97 = vld [vmem:[#allocation5 + $0x140] sm:$0xff]
    %v98 = vld [vmem:[#allocation5 + $0x148] sm:$0xff]
    %v99 = vld [vmem:[#allocation5 + $0x150] sm:$0xff]
    %v100 = vld [vmem:[#allocation5 + $0x158] sm:$0xff]
    %v101 = vld [vmem:[#allocation5 + $0x160] sm:$0xff]
    %v102 = vld [vmem:[#allocation5 + $0x168] sm:$0xff]
    %v103 = vld [vmem:[#allocation5 + $0x170] sm:$0xff]
    %v104 = vld [vmem:[#allocation5 + $0x178] sm:$0xff]
    %v105 = vld [vmem:[#allocation5 + $0x180] sm:$0xff]
    %v106 = vld [vmem:[#allocation5 + $0x188] sm:$0xff]
    %v107 = vld [vmem:[#allocation5 + $0x190] sm:$0xff]
    %v108 = vld [vmem:[#allocation5 + $0x198] sm:$0xff]
    %v109 = vld [vmem:[#allocation5 + $0x1a0] sm:$0xff]
    %v110 = vld [vmem:[#allocation5 + $0x1a8] sm:$0xff]
    %v111 = vld [vmem:[#allocation5 + $0x1b0] sm:$0xff]
    %v112 = vld [vmem:[#allocation5 + $0x1b8] sm:$0xff]
    %v113 = vld [vmem:[#allocation5 + $0x1c0] sm:$0xff]
    %v114 = vld [vmem:[#allocation5 + $0x1c8] sm:$0xff]
    %v115 = vld [vmem:[#allocation5 + $0x1d0] sm:$0xff]
    %v116 = vld [vmem:[#allocation5 + $0x1d8] sm:$0xff]
    %v117 = vld [vmem:[#allocation5 + $0x1e0] sm:$0xff]
    %v118 = vld [vmem:[#allocation5 + $0x1e8] sm:$0xff]
    %v119 = vld [vmem:[#allocation5 + $0x1f0] sm:$0xff]
    %v120 = vld [vmem:[#allocation5 + $0x1f8] sm:$0xff]
    %v121 = vld [vmem:[#allocation5 + $0x200] sm:$0xff]
    %v122 = vld [vmem:[#allocation5 + $0x208] sm:$0xff]
    %v123 = vld [vmem:[#allocation5 + $0x210] sm:$0xff]
    %v124 = vld [vmem:[#allocation5 + $0x218] sm:$0xff]
    %v125 = vld [vmem:[#allocation5 + $0x220] sm:$0xff]
    %v126 = vld [vmem:[#allocation5 + $0x228] sm:$0xff]
    %v127 = vld [vmem:[#allocation5 + $0x230] sm:$0xff]
    %v128 = vld [vmem:[#allocation5 + $0x238] sm:$0xff]
    %v129 = vld [vmem:[#allocation5 + $0x240] sm:$0xff]
    %v130 = vld [vmem:[#allocation5 + $0x248] sm:$0xff]
    %v131 = vld [vmem:[#allocation5 + $0x250] sm:$0xff]
    %v132 = vld [vmem:[#allocation5 + $0x258] sm:$0xff]
    %v133 = vld [vmem:[#allocation5 + $0x260] sm:$0xff]
    %v134 = vld [vmem:[#allocation5 + $0x268] sm:$0xff]
    %v135 = vld [vmem:[#allocation5 + $0x270] sm:$0xff]
    %v136 = vld [vmem:[#allocation5 + $0x278] sm:$0xff]
    %v137 = vld [vmem:[#allocation5 + $0x280] sm:$0xff]
    %v138 = vld [vmem:[#allocation5 + $0x288] sm:$0xff]
    %v139 = vld [vmem:[#allocation5 + $0x290] sm:$0xff]
    %v140 = vld [vmem:[#allocation5 + $0x298] sm:$0xff]
    %v141 = vld [vmem:[#allocation5 + $0x2a0] sm:$0xff]
    %v142 = vld [vmem:[#allocation5 + $0x2a8] sm:$0xff]
    %v143 = vld [vmem:[#allocation5 + $0x2b0] sm:$0xff]
    %v144 = vld [vmem:[#allocation5 + $0x2b8] sm:$0xff]
    %v145 = vld [vmem:[#allocation5 + $0x2c0] sm:$0xff]
    %v146 = vld [vmem:[#allocation5 + $0x2c8] sm:$0xff]
    %v147 = vld [vmem:[#allocation5 + $0x2d0] sm:$0xff]
    %v148 = vld [vmem:[#allocation5 + $0x2d8] sm:$0xff]
    %v149 = vld [vmem:[#allocation5 + $0x2e0] sm:$0xff]
    %v150 = vld [vmem:[#allocation5 + $0x2e8] sm:$0xff]
    %v151 = vld [vmem:[#allocation5 + $0x2f0] sm:$0xff]
    %v152 = vld [vmem:[#allocation5 + $0x2f8] sm:$0xff]
    %v153 = vld [vmem:[#allocation5 + $0x300] sm:$0x3]
    %v154 = vld [vmem:[#allocation5 + $0x308] sm:$0x3]
    %v155 = vld [vmem:[#allocation5 + $0x310] sm:$0x3]
    %v156 = vld [vmem:[#allocation5 + $0x318] sm:$0x3]
    %v157 = vld [vmem:[#allocation5 + $0x320] sm:$0x3]
    %v158 = vld [vmem:[#allocation5 + $0x328] sm:$0x3]
    %v159 = vld [vmem:[#allocation5 + $0x330] sm:$0x3]
    %v160 = vld [vmem:[#allocation5 + $0x338] sm:$0x3]
    %v161 = vld [vmem:[#allocation5 + $0x340] sm:$0x3]
    %v162 = vld [vmem:[#allocation5 + $0x348] sm:$0x3]
    %v163 = vld [vmem:[#allocation5 + $0x350] sm:$0x3]
    %v164 = vld [vmem:[#allocation5 + $0x358] sm:$0x3]
    %v165 = vld [vmem:[#allocation5 + $0x360] sm:$0x3]
    %v166 = vld [vmem:[#allocation5 + $0x368] sm:$0x3]
    %v167 = vld [vmem:[#allocation5 + $0x370] sm:$0x3]
    %v168 = vld [vmem:[#allocation5 + $0x378] sm:$0x3]
    %v169 = vld [vmem:[%s2] sm:$0x1]
    %v171 = vlaneseq
    %v172 = vshrl.u32 %v171, 7
    %v173 = vsub.s32 0, %v172
    %v174 = vrot.slane %v169, %v173
    %176 = vmatprep.subr.mxu0 %v58
    %177 = vmatpush1.xpose.msra.mxu0 %v57
    %178 = vmatprep.subr.mxu0 %v74
    %179 = vmatpush1.xpose.msra.mxu0 %v73
    %180 = vmatprep.subr.mxu0 %v90
    %181 = vmatpush1.xpose.msra.mxu0 %v89
    %182 = vmatprep.subr.mxu0 %v106
    %183 = vmatpush1.xpose.msra.mxu0 %v105
    %184 = vmatprep.subr.mxu0 %v122
    %185 = vmatpush1.xpose.msra.mxu0 %v121
    %186 = vmatprep.subr.mxu0 %v138
    %187 = vmatpush1.xpose.msra.mxu0 %v137
    %188 = vmatprep.subr.mxu0 %v154
    %189 = vmatpush1.xpose.msra.mxu0 %v153
    %190 = vmatprep.subr.mxu0 0.0
    %191 = vmatpush1.xpose.msra.mxu0 0.0
    %192 = vmatprep.subr.mxu0 0.0
    %193 = vmatpush1.xpose.msra.mxu0 0.0
    %194 = vmatprep.subr.mxu0 0.0
    %195 = vmatpush1.xpose.msra.mxu0 0.0
    %196 = vmatprep.subr.mxu0 0.0
    %197 = vmatpush1.xpose.msra.mxu0 0.0
    %198 = vmatprep.subr.mxu0 0.0
    %199 = vmatpush1.xpose.msra.mxu0 0.0
    %200 = vmatprep.subr.mxu0 0.0
    %201 = vmatpush1.xpose.msra.mxu0 0.0
    %202 = vmatprep.subr.mxu0 0.0
    %203 = vmatpush1.xpose.msra.mxu0 0.0
    %204 = vmatprep.subr.mxu0 0.0
    %205 = vmatpush1.xpose.msra.mxu0 0.0
    %206 = vmatprep.subr.mxu0 0.0
    %207 = vmatpush1.xpose.msra.mxu0 0.0
    %208 = vmatprep.subr.mxu0 0.0
    %209 = vmatpush1.xpose.msra.mxu0 0.0
    %210 = vmatprep.subr.mxu0 0.0
    %211 = vmatpush1.xpose.msra.mxu0 0.0
    %212 = vmatprep.subr.mxu0 0.0
    %213 = vmatpush1.xpose.msra.mxu0 0.0
    %214 = vmatprep.subr.mxu0 0.0
    %215 = vmatpush1.xpose.msra.mxu0 0.0
    %216 = vmatprep.subr.mxu0 0.0
    %217 = vmatpush1.xpose.msra.mxu0 0.0
    %218 = vmatprep.subr.mxu0 0.0
    %219 = vmatpush1.xpose.msra.mxu0 0.0
    %220 = vmatprep.subr.mxu0 0.0
    %221 = vmatpush1.xpose.msra.mxu0 0.0
    %222 = vmatprep.subr.mxu0 0.0
    %223 = vmatpush1.xpose.msra.mxu0 0.0
    %224 = vmatprep.subr.mxu0 0.0
    %225 = vmatpush1.xpose.msra.mxu0 0.0
    %226 = vmatprep.subr.mxu0 0.0
    %227 = vmatpush1.xpose.msra.mxu0 0.0
    %228 = vmatprep.subr.mxu0 0.0
    %229 = vmatpush1.xpose.msra.mxu0 0.0
    %230 = vmatprep.subr.mxu0 0.0
    %231 = vmatpush1.xpose.msra.mxu0 0.0
    %232 = vmatprep.subr.mxu0 0.0
    %233 = vmatpush1.xpose.msra.mxu0 0.0
    %234 = vmatprep.subr.mxu0 0.0
    %235 = vmatpush1.xpose.msra.mxu0 0.0
    %236 = vmatprep.subr.mxu0 0.0
    %237 = vmatpush1.xpose.msra.mxu0 0.0
    %238 = vmatprep.subr.mxu0 0.0
    %239 = vmatpush1.xpose.msra.mxu0 0.0
    %240 = vmatprep.mubr.f32.mxu0 %v42
    %241 = vmatmul.mubr.f32.gmra.mrb[0].mxu0 %v41
    %v242 = vpop.f32.mrb[0].mxu0
    %v243 = vadd.f32 %v174, %v242
    %v244 = vpop.f32.mrb[0].mxu0
    %245 = vdwg.mxu0
    %246 = vmatprep.subr.mxu0 %v60
    %247 = vmatpush1.xpose.msra.mxu0 %v59
    %248 = vmatprep.subr.mxu0 %v76
    %249 = vmatpush1.xpose.msra.mxu0 %v75
    %250 = vmatprep.subr.mxu0 %v92
    %251 = vmatpush1.xpose.msra.mxu0 %v91
    %252 = vmatprep.subr.mxu0 %v108
    %253 = vmatpush1.xpose.msra.mxu0 %v107
    %254 = vmatprep.subr.mxu0 %v124
    %255 = vmatpush1.xpose.msra.mxu0 %v123
    %256 = vmatprep.subr.mxu0 %v140
    %257 = vmatpush1.xpose.msra.mxu0 %v139
    %258 = vmatprep.subr.mxu0 %v156
    %259 = vmatpush1.xpose.msra.mxu0 %v155
    %260 = vmatprep.subr.mxu0 0.0
    %261 = vmatpush1.xpose.msra.mxu0 0.0
    %262 = vmatprep.subr.mxu0 0.0
    %263 = vmatpush1.xpose.msra.mxu0 0.0
    %264 = vmatprep.subr.mxu0 0.0
    %265 = vmatpush1.xpose.msra.mxu0 0.0
    %266 = vmatprep.subr.mxu0 0.0
    %267 = vmatpush1.xpose.msra.mxu0 0.0
    %268 = vmatprep.subr.mxu0 0.0
    %269 = vmatpush1.xpose.msra.mxu0 0.0
    %270 = vmatprep.subr.mxu0 0.0
    %271 = vmatpush1.xpose.msra.mxu0 0.0
    %272 = vmatprep.subr.mxu0 0.0
    %273 = vmatpush1.xpose.msra.mxu0 0.0
    %274 = vmatprep.subr.mxu0 0.0
    %275 = vmatpush1.xpose.msra.mxu0 0.0
    %276 = vmatprep.subr.mxu0 0.0
    %277 = vmatpush1.xpose.msra.mxu0 0.0
    %278 = vmatprep.subr.mxu0 0.0
    %279 = vmatpush1.xpose.msra.mxu0 0.0
    %280 = vmatprep.subr.mxu0 0.0
    %281 = vmatpush1.xpose.msra.mxu0 0.0
    %282 = vmatprep.subr.mxu0 0.0
    %283 = vmatpush1.xpose.msra.mxu0 0.0
    %284 = vmatprep.subr.mxu0 0.0
    %285 = vmatpush1.xpose.msra.mxu0 0.0
    %286 = vmatprep.subr.mxu0 0.0
    %287 = vmatpush1.xpose.msra.mxu0 0.0
    %288 = vmatprep.subr.mxu0 0.0
    %289 = vmatpush1.xpose.msra.mxu0 0.0
    %290 = vmatprep.subr.mxu0 0.0
    %291 = vmatpush1.xpose.msra.mxu0 0.0
    %292 = vmatprep.subr.mxu0 0.0
    %293 = vmatpush1.xpose.msra.mxu0 0.0
    %294 = vmatprep.subr.mxu0 0.0
    %295 = vmatpush1.xpose.msra.mxu0 0.0
    %296 = vmatprep.subr.mxu0 0.0
    %297 = vmatpush1.xpose.msra.mxu0 0.0
    %298 = vmatprep.subr.mxu0 0.0
    %299 = vmatpush1.xpose.msra.mxu0 0.0
    %300 = vmatprep.subr.mxu0 0.0
    %301 = vmatpush1.xpose.msra.mxu0 0.0
    %302 = vmatprep.subr.mxu0 0.0
    %303 = vmatpush1.xpose.msra.mxu0 0.0
    %304 = vmatprep.subr.mxu0 0.0
    %305 = vmatpush1.xpose.msra.mxu0 0.0
    %306 = vmatprep.subr.mxu0 0.0
    %307 = vmatpush1.xpose.msra.mxu0 0.0
    %308 = vmatprep.subr.mxu0 0.0
    %309 = vmatpush1.xpose.msra.mxu0 0.0
    %310 = vmatprep.mubr.f32.mxu0 %v44
    %311 = vmatmul.mubr.f32.gmra.mrb[0].mxu0 %v43
    %v312 = vpop.f32.mrb[0].mxu0
    %v313 = vadd.f32 %v243, %v312
    %v314 = vpop.f32.mrb[0].mxu0
    %315 = vdwg.mxu0
    %316 = vmatprep.subr.mxu0 %v62
    %317 = vmatpush1.xpose.msra.mxu0 %v61
    %318 = vmatprep.subr.mxu0 %v78
    %319 = vmatpush1.xpose.msra.mxu0 %v77
    %320 = vmatprep.subr.mxu0 %v94
    %321 = vmatpush1.xpose.msra.mxu0 %v93
    %322 = vmatprep.subr.mxu0 %v110
    %323 = vmatpush1.xpose.msra.mxu0 %v109
    %324 = vmatprep.subr.mxu0 %v126
    %325 = vmatpush1.xpose.msra.mxu0 %v125
    %326 = vmatprep.subr.mxu0 %v142
    %327 = vmatpush1.xpose.msra.mxu0 %v141
    %328 = vmatprep.subr.mxu0 %v158
    %329 = vmatpush1.xpose.msra.mxu0 %v157
    %330 = vmatprep.subr.mxu0 0.0
    %331 = vmatpush1.xpose.msra.mxu0 0.0
    %332 = vmatprep.subr.mxu0 0.0
    %333 = vmatpush1.xpose.msra.mxu0 0.0
    %334 = vmatprep.subr.mxu0 0.0
    %335 = vmatpush1.xpose.msra.mxu0 0.0
    %336 = vmatprep.subr.mxu0 0.0
    %337 = vmatpush1.xpose.msra.mxu0 0.0
    %338 = vmatprep.subr.mxu0 0.0
    %339 = vmatpush1.xpose.msra.mxu0 0.0
    %340 = vmatprep.subr.mxu0 0.0
    %341 = vmatpush1.xpose.msra.mxu0 0.0
    %342 = vmatprep.subr.mxu0 0.0
    %343 = vmatpush1.xpose.msra.mxu0 0.0
    %344 = vmatprep.subr.mxu0 0.0
    %345 = vmatpush1.xpose.msra.mxu0 0.0
    %346 = vmatprep.subr.mxu0 0.0
    %347 = vmatpush1.xpose.msra.mxu0 0.0
    %348 = vmatprep.subr.mxu0 0.0
    %349 = vmatpush1.xpose.msra.mxu0 0.0
    %350 = vmatprep.subr.mxu0 0.0
    %351 = vmatpush1.xpose.msra.mxu0 0.0
    %352 = vmatprep.subr.mxu0 0.0
    %353 = vmatpush1.xpose.msra.mxu0 0.0
    %354 = vmatprep.subr.mxu0 0.0
    %355 = vmatpush1.xpose.msra.mxu0 0.0
    %356 = vmatprep.subr.mxu0 0.0
    %357 = vmatpush1.xpose.msra.mxu0 0.0
    %358 = vmatprep.subr.mxu0 0.0
    %359 = vmatpush1.xpose.msra.mxu0 0.0
    %360 = vmatprep.subr.mxu0 0.0
    %361 = vmatpush1.xpose.msra.mxu0 0.0
    %362 = vmatprep.subr.mxu0 0.0
    %363 = vmatpush1.xpose.msra.mxu0 0.0
    %364 = vmatprep.subr.mxu0 0.0
    %365 = vmatpush1.xpose.msra.mxu0 0.0
    %366 = vmatprep.subr.mxu0 0.0
    %367 = vmatpush1.xpose.msra.mxu0 0.0
    %368 = vmatprep.subr.mxu0 0.0
    %369 = vmatpush1.xpose.msra.mxu0 0.0
    %370 = vmatprep.subr.mxu0 0.0
    %371 = vmatpush1.xpose.msra.mxu0 0.0
    %372 = vmatprep.subr.mxu0 0.0
    %373 = vmatpush1.xpose.msra.mxu0 0.0
    %374 = vmatprep.subr.mxu0 0.0
    %375 = vmatpush1.xpose.msra.mxu0 0.0
    %376 = vmatprep.subr.mxu0 0.0
    %377 = vmatpush1.xpose.msra.mxu0 0.0
    %378 = vmatprep.subr.mxu0 0.0
    %379 = vmatpush1.xpose.msra.mxu0 0.0
    %380 = vmatprep.mubr.f32.mxu0 %v46
    %381 = vmatmul.mubr.f32.gmra.mrb[0].mxu0 %v45
    %v382 = vpop.f32.mrb[0].mxu0
    %v383 = vadd.f32 %v313, %v382
    %v384 = vpop.f32.mrb[0].mxu0
    %385 = vdwg.mxu0
    %386 = vmatprep.subr.mxu0 %v64
    %387 = vmatpush1.xpose.msra.mxu0 %v63
    %388 = vmatprep.subr.mxu0 %v80
    %389 = vmatpush1.xpose.msra.mxu0 %v79
    %390 = vmatprep.subr.mxu0 %v96
    %391 = vmatpush1.xpose.msra.mxu0 %v95
    %392 = vmatprep.subr.mxu0 %v112
    %393 = vmatpush1.xpose.msra.mxu0 %v111
    %394 = vmatprep.subr.mxu0 %v128
    %395 = vmatpush1.xpose.msra.mxu0 %v127
    %396 = vmatprep.subr.mxu0 %v144
    %397 = vmatpush1.xpose.msra.mxu0 %v143
    %398 = vmatprep.subr.mxu0 %v160
    %399 = vmatpush1.xpose.msra.mxu0 %v159
    %400 = vmatprep.subr.mxu0 0.0
    %401 = vmatpush1.xpose.msra.mxu0 0.0
    %402 = vmatprep.subr.mxu0 0.0
    %403 = vmatpush1.xpose.msra.mxu0 0.0
    %404 = vmatprep.subr.mxu0 0.0
    %405 = vmatpush1.xpose.msra.mxu0 0.0
    %406 = vmatprep.subr.mxu0 0.0
    %407 = vmatpush1.xpose.msra.mxu0 0.0
    %408 = vmatprep.subr.mxu0 0.0
    %409 = vmatpush1.xpose.msra.mxu0 0.0
    %410 = vmatprep.subr.mxu0 0.0
    %411 = vmatpush1.xpose.msra.mxu0 0.0
    %412 = vmatprep.subr.mxu0 0.0
    %413 = vmatpush1.xpose.msra.mxu0 0.0
    %414 = vmatprep.subr.mxu0 0.0
    %415 = vmatpush1.xpose.msra.mxu0 0.0
    %416 = vmatprep.subr.mxu0 0.0
    %417 = vmatpush1.xpose.msra.mxu0 0.0
    %418 = vmatprep.subr.mxu0 0.0
    %419 = vmatpush1.xpose.msra.mxu0 0.0
    %420 = vmatprep.subr.mxu0 0.0
    %421 = vmatpush1.xpose.msra.mxu0 0.0
    %422 = vmatprep.subr.mxu0 0.0
    %423 = vmatpush1.xpose.msra.mxu0 0.0
    %424 = vmatprep.subr.mxu0 0.0
    %425 = vmatpush1.xpose.msra.mxu0 0.0
    %426 = vmatprep.subr.mxu0 0.0
    %427 = vmatpush1.xpose.msra.mxu0 0.0
    %428 = vmatprep.subr.mxu0 0.0
    %429 = vmatpush1.xpose.msra.mxu0 0.0
    %430 = vmatprep.subr.mxu0 0.0
    %431 = vmatpush1.xpose.msra.mxu0 0.0
    %432 = vmatprep.subr.mxu0 0.0
    %433 = vmatpush1.xpose.msra.mxu0 0.0
    %434 = vmatprep.subr.mxu0 0.0
    %435 = vmatpush1.xpose.msra.mxu0 0.0
    %436 = vmatprep.subr.mxu0 0.0
    %437 = vmatpush1.xpose.msra.mxu0 0.0
    %438 = vmatprep.subr.mxu0 0.0
    %439 = vmatpush1.xpose.msra.mxu0 0.0
    %440 = vmatprep.subr.mxu0 0.0
    %441 = vmatpush1.xpose.msra.mxu0 0.0
    %442 = vmatprep.subr.mxu0 0.0
    %443 = vmatpush1.xpose.msra.mxu0 0.0
    %444 = vmatprep.subr.mxu0 0.0
    %445 = vmatpush1.xpose.msra.mxu0 0.0
    %446 = vmatprep.subr.mxu0 0.0
    %447 = vmatpush1.xpose.msra.mxu0 0.0
    %448 = vmatprep.subr.mxu0 0.0
    %449 = vmatpush1.xpose.msra.mxu0 0.0
    %450 = vmatprep.mubr.f32.mxu0 %v48
    %451 = vmatmul.mubr.f32.gmra.mrb[0].mxu0 %v47
    %v452 = vpop.f32.mrb[0].mxu0
    %v453 = vadd.f32 %v383, %v452
    %v454 = vpop.f32.mrb[0].mxu0
    %455 = vdwg.mxu0
    %456 = vmatprep.subr.mxu0 %v66
    %457 = vmatpush1.xpose.msra.mxu0 %v65
    %458 = vmatprep.subr.mxu0 %v82
    %459 = vmatpush1.xpose.msra.mxu0 %v81
    %460 = vmatprep.subr.mxu0 %v98
    %461 = vmatpush1.xpose.msra.mxu0 %v97
    %462 = vmatprep.subr.mxu0 %v114
    %463 = vmatpush1.xpose.msra.mxu0 %v113
    %464 = vmatprep.subr.mxu0 %v130
    %465 = vmatpush1.xpose.msra.mxu0 %v129
    %466 = vmatprep.subr.mxu0 %v146
    %467 = vmatpush1.xpose.msra.mxu0 %v145
    %468 = vmatprep.subr.mxu0 %v162
    %469 = vmatpush1.xpose.msra.mxu0 %v161
    %470 = vmatprep.subr.mxu0 0.0
    %471 = vmatpush1.xpose.msra.mxu0 0.0
    %472 = vmatprep.subr.mxu0 0.0
    %473 = vmatpush1.xpose.msra.mxu0 0.0
    %474 = vmatprep.subr.mxu0 0.0
    %475 = vmatpush1.xpose.msra.mxu0 0.0
    %476 = vmatprep.subr.mxu0 0.0
    %477 = vmatpush1.xpose.msra.mxu0 0.0
    %478 = vmatprep.subr.mxu0 0.0
    %479 = vmatpush1.xpose.msra.mxu0 0.0
    %480 = vmatprep.subr.mxu0 0.0
    %481 = vmatpush1.xpose.msra.mxu0 0.0
    %482 = vmatprep.subr.mxu0 0.0
    %483 = vmatpush1.xpose.msra.mxu0 0.0
    %484 = vmatprep.subr.mxu0 0.0
    %485 = vmatpush1.xpose.msra.mxu0 0.0
    %486 = vmatprep.subr.mxu0 0.0
    %487 = vmatpush1.xpose.msra.mxu0 0.0
    %488 = vmatprep.subr.mxu0 0.0
    %489 = vmatpush1.xpose.msra.mxu0 0.0
    %490 = vmatprep.subr.mxu0 0.0
    %491 = vmatpush1.xpose.msra.mxu0 0.0
    %492 = vmatprep.subr.mxu0 0.0
    %493 = vmatpush1.xpose.msra.mxu0 0.0
    %494 = vmatprep.subr.mxu0 0.0
    %495 = vmatpush1.xpose.msra.mxu0 0.0
    %496 = vmatprep.subr.mxu0 0.0
    %497 = vmatpush1.xpose.msra.mxu0 0.0
    %498 = vmatprep.subr.mxu0 0.0
    %499 = vmatpush1.xpose.msra.mxu0 0.0
    %500 = vmatprep.subr.mxu0 0.0
    %501 = vmatpush1.xpose.msra.mxu0 0.0
    %502 = vmatprep.subr.mxu0 0.0
    %503 = vmatpush1.xpose.msra.mxu0 0.0
    %504 = vmatprep.subr.mxu0 0.0
    %505 = vmatpush1.xpose.msra.mxu0 0.0
    %506 = vmatprep.subr.mxu0 0.0
    %507 = vmatpush1.xpose.msra.mxu0 0.0
    %508 = vmatprep.subr.mxu0 0.0
    %509 = vmatpush1.xpose.msra.mxu0 0.0
    %510 = vmatprep.subr.mxu0 0.0
    %511 = vmatpush1.xpose.msra.mxu0 0.0
    %512 = vmatprep.subr.mxu0 0.0
    %513 = vmatpush1.xpose.msra.mxu0 0.0
    %514 = vmatprep.subr.mxu0 0.0
    %515 = vmatpush1.xpose.msra.mxu0 0.0
    %516 = vmatprep.subr.mxu0 0.0
    %517 = vmatpush1.xpose.msra.mxu0 0.0
    %518 = vmatprep.subr.mxu0 0.0
    %519 = vmatpush1.xpose.msra.mxu0 0.0
    %520 = vmatprep.mubr.f32.mxu0 %v50
    %521 = vmatmul.mubr.f32.gmra.mrb[0].mxu0 %v49
    %v522 = vpop.f32.mrb[0].mxu0
    %v523 = vadd.f32 %v453, %v522
    %v524 = vpop.f32.mrb[0].mxu0
    %525 = vdwg.mxu0
    %526 = vmatprep.subr.mxu0 %v68
    %527 = vmatpush1.xpose.msra.mxu0 %v67
    %528 = vmatprep.subr.mxu0 %v84
    %529 = vmatpush1.xpose.msra.mxu0 %v83
    %530 = vmatprep.subr.mxu0 %v100
    %531 = vmatpush1.xpose.msra.mxu0 %v99
    %532 = vmatprep.subr.mxu0 %v116
    %533 = vmatpush1.xpose.msra.mxu0 %v115
    %534 = vmatprep.subr.mxu0 %v132
    %535 = vmatpush1.xpose.msra.mxu0 %v131
    %536 = vmatprep.subr.mxu0 %v148
    %537 = vmatpush1.xpose.msra.mxu0 %v147
    %538 = vmatprep.subr.mxu0 %v164
    %539 = vmatpush1.xpose.msra.mxu0 %v163
    %540 = vmatprep.subr.mxu0 0.0
    %541 = vmatpush1.xpose.msra.mxu0 0.0
    %542 = vmatprep.subr.mxu0 0.0
    %543 = vmatpush1.xpose.msra.mxu0 0.0
    %544 = vmatprep.subr.mxu0 0.0
    %545 = vmatpush1.xpose.msra.mxu0 0.0
    %546 = vmatprep.subr.mxu0 0.0
    %547 = vmatpush1.xpose.msra.mxu0 0.0
    %548 = vmatprep.subr.mxu0 0.0
    %549 = vmatpush1.xpose.msra.mxu0 0.0
    %550 = vmatprep.subr.mxu0 0.0
    %551 = vmatpush1.xpose.msra.mxu0 0.0
    %552 = vmatprep.subr.mxu0 0.0
    %553 = vmatpush1.xpose.msra.mxu0 0.0
    %554 = vmatprep.subr.mxu0 0.0
    %555 = vmatpush1.xpose.msra.mxu0 0.0
    %556 = vmatprep.subr.mxu0 0.0
    %557 = vmatpush1.xpose.msra.mxu0 0.0
    %558 = vmatprep.subr.mxu0 0.0
    %559 = vmatpush1.xpose.msra.mxu0 0.0
    %560 = vmatprep.subr.mxu0 0.0
    %561 = vmatpush1.xpose.msra.mxu0 0.0
    %562 = vmatprep.subr.mxu0 0.0
    %563 = vmatpush1.xpose.msra.mxu0 0.0
    %564 = vmatprep.subr.mxu0 0.0
    %565 = vmatpush1.xpose.msra.mxu0 0.0
    %566 = vmatprep.subr.mxu0 0.0
    %567 = vmatpush1.xpose.msra.mxu0 0.0
    %568 = vmatprep.subr.mxu0 0.0
    %569 = vmatpush1.xpose.msra.mxu0 0.0
    %570 = vmatprep.subr.mxu0 0.0
    %571 = vmatpush1.xpose.msra.mxu0 0.0
    %572 = vmatprep.subr.mxu0 0.0
    %573 = vmatpush1.xpose.msra.mxu0 0.0
    %574 = vmatprep.subr.mxu0 0.0
    %575 = vmatpush1.xpose.msra.mxu0 0.0
    %576 = vmatprep.subr.mxu0 0.0
    %577 = vmatpush1.xpose.msra.mxu0 0.0
    %578 = vmatprep.subr.mxu0 0.0
    %579 = vmatpush1.xpose.msra.mxu0 0.0
    %580 = vmatprep.subr.mxu0 0.0
    %581 = vmatpush1.xpose.msra.mxu0 0.0
    %582 = vmatprep.subr.mxu0 0.0
    %583 = vmatpush1.xpose.msra.mxu0 0.0
    %584 = vmatprep.subr.mxu0 0.0
    %585 = vmatpush1.xpose.msra.mxu0 0.0
    %586 = vmatprep.subr.mxu0 0.0
    %587 = vmatpush1.xpose.msra.mxu0 0.0
    %588 = vmatprep.subr.mxu0 0.0
    %589 = vmatpush1.xpose.msra.mxu0 0.0
    %590 = vmatprep.mubr.f32.mxu0 %v52
    %591 = vmatmul.mubr.f32.gmra.mrb[0].mxu0 %v51
    %v592 = vpop.f32.mrb[0].mxu0
    %v593 = vadd.f32 %v523, %v592
    %v594 = vpop.f32.mrb[0].mxu0
    %595 = vdwg.mxu0
    %596 = vmatprep.subr.mxu0 %v70
    %597 = vmatpush1.xpose.msra.mxu0 %v69
    %598 = vmatprep.subr.mxu0 %v86
    %599 = vmatpush1.xpose.msra.mxu0 %v85
    %600 = vmatprep.subr.mxu0 %v102
    %601 = vmatpush1.xpose.msra.mxu0 %v101
    %602 = vmatprep.subr.mxu0 %v118
    %603 = vmatpush1.xpose.msra.mxu0 %v117
    %604 = vmatprep.subr.mxu0 %v134
    %605 = vmatpush1.xpose.msra.mxu0 %v133
    %606 = vmatprep.subr.mxu0 %v150
    %607 = vmatpush1.xpose.msra.mxu0 %v149
    %608 = vmatprep.subr.mxu0 %v166
    %609 = vmatpush1.xpose.msra.mxu0 %v165
    %610 = vmatprep.subr.mxu0 0.0
    %611 = vmatpush1.xpose.msra.mxu0 0.0
    %612 = vmatprep.subr.mxu0 0.0
    %613 = vmatpush1.xpose.msra.mxu0 0.0
    %614 = vmatprep.subr.mxu0 0.0
    %615 = vmatpush1.xpose.msra.mxu0 0.0
    %616 = vmatprep.subr.mxu0 0.0
    %617 = vmatpush1.xpose.msra.mxu0 0.0
    %618 = vmatprep.subr.mxu0 0.0
    %619 = vmatpush1.xpose.msra.mxu0 0.0
    %620 = vmatprep.subr.mxu0 0.0
    %621 = vmatpush1.xpose.msra.mxu0 0.0
    %622 = vmatprep.subr.mxu0 0.0
    %623 = vmatpush1.xpose.msra.mxu0 0.0
    %624 = vmatprep.subr.mxu0 0.0
    %625 = vmatpush1.xpose.msra.mxu0 0.0
    %626 = vmatprep.subr.mxu0 0.0
    %627 = vmatpush1.xpose.msra.mxu0 0.0
    %628 = vmatprep.subr.mxu0 0.0
    %629 = vmatpush1.xpose.msra.mxu0 0.0
    %630 = vmatprep.subr.mxu0 0.0
    %631 = vmatpush1.xpose.msra.mxu0 0.0
    %632 = vmatprep.subr.mxu0 0.0
    %633 = vmatpush1.xpose.msra.mxu0 0.0
    %634 = vmatprep.subr.mxu0 0.0
    %635 = vmatpush1.xpose.msra.mxu0 0.0
    %636 = vmatprep.subr.mxu0 0.0
    %637 = vmatpush1.xpose.msra.mxu0 0.0
    %638 = vmatprep.subr.mxu0 0.0
    %639 = vmatpush1.xpose.msra.mxu0 0.0
    %640 = vmatprep.subr.mxu0 0.0
    %641 = vmatpush1.xpose.msra.mxu0 0.0
    %642 = vmatprep.subr.mxu0 0.0
    %643 = vmatpush1.xpose.msra.mxu0 0.0
    %644 = vmatprep.subr.mxu0 0.0
    %645 = vmatpush1.xpose.msra.mxu0 0.0
    %646 = vmatprep.subr.mxu0 0.0
    %647 = vmatpush1.xpose.msra.mxu0 0.0
    %648 = vmatprep.subr.mxu0 0.0
    %649 = vmatpush1.xpose.msra.mxu0 0.0
    %650 = vmatprep.subr.mxu0 0.0
    %651 = vmatpush1.xpose.msra.mxu0 0.0
    %652 = vmatprep.subr.mxu0 0.0
    %653 = vmatpush1.xpose.msra.mxu0 0.0
    %654 = vmatprep.subr.mxu0 0.0
    %655 = vmatpush1.xpose.msra.mxu0 0.0
    %656 = vmatprep.subr.mxu0 0.0
    %657 = vmatpush1.xpose.msra.mxu0 0.0
    %658 = vmatprep.subr.mxu0 0.0
    %659 = vmatpush1.xpose.msra.mxu0 0.0
    %660 = vmatprep.mubr.f32.mxu0 %v54
    %661 = vmatmul.mubr.f32.gmra.mrb[0].mxu0 %v53
    %v662 = vpop.f32.mrb[0].mxu0
    %v663 = vadd.f32 %v593, %v662
    %v664 = vpop.f32.mrb[0].mxu0
    %665 = vdwg.mxu0
    %666 = vmatprep.subr.mxu0 %v72
    %667 = vmatpush1.xpose.msra.mxu0 %v71
    %668 = vmatprep.subr.mxu0 %v88
    %669 = vmatpush1.xpose.msra.mxu0 %v87
    %670 = vmatprep.subr.mxu0 %v104
    %671 = vmatpush1.xpose.msra.mxu0 %v103
    %672 = vmatprep.subr.mxu0 %v120
    %673 = vmatpush1.xpose.msra.mxu0 %v119
    %674 = vmatprep.subr.mxu0 %v136
    %675 = vmatpush1.xpose.msra.mxu0 %v135
    %676 = vmatprep.subr.mxu0 %v152
    %677 = vmatpush1.xpose.msra.mxu0 %v151
    %678 = vmatprep.subr.mxu0 %v168
    %679 = vmatpush1.xpose.msra.mxu0 %v167
    %680 = vmatprep.subr.mxu0 0.0
    %681 = vmatpush1.xpose.msra.mxu0 0.0
    %682 = vmatprep.subr.mxu0 0.0
    %683 = vmatpush1.xpose.msra.mxu0 0.0
    %684 = vmatprep.subr.mxu0 0.0
    %685 = vmatpush1.xpose.msra.mxu0 0.0
    %686 = vmatprep.subr.mxu0 0.0
    %687 = vmatpush1.xpose.msra.mxu0 0.0
    %688 = vmatprep.subr.mxu0 0.0
    %689 = vmatpush1.xpose.msra.mxu0 0.0
    %690 = vmatprep.subr.mxu0 0.0
    %691 = vmatpush1.xpose.msra.mxu0 0.0
    %692 = vmatprep.subr.mxu0 0.0
    %693 = vmatpush1.xpose.msra.mxu0 0.0
    %694 = vmatprep.subr.mxu0 0.0
    %695 = vmatpush1.xpose.msra.mxu0 0.0
    %696 = vmatprep.subr.mxu0 0.0
    %697 = vmatpush1.xpose.msra.mxu0 0.0
    %698 = vmatprep.subr.mxu0 0.0
    %699 = vmatpush1.xpose.msra.mxu0 0.0
    %700 = vmatprep.subr.mxu0 0.0
    %701 = vmatpush1.xpose.msra.mxu0 0.0
    %702 = vmatprep.subr.mxu0 0.0
    %703 = vmatpush1.xpose.msra.mxu0 0.0
    %704 = vmatprep.subr.mxu0 0.0
    %705 = vmatpush1.xpose.msra.mxu0 0.0
    %706 = vmatprep.subr.mxu0 0.0
    %707 = vmatpush1.xpose.msra.mxu0 0.0
    %708 = vmatprep.subr.mxu0 0.0
    %709 = vmatpush1.xpose.msra.mxu0 0.0
    %710 = vmatprep.subr.mxu0 0.0
    %711 = vmatpush1.xpose.msra.mxu0 0.0
    %712 = vmatprep.subr.mxu0 0.0
    %713 = vmatpush1.xpose.msra.mxu0 0.0
    %714 = vmatprep.subr.mxu0 0.0
    %715 = vmatpush1.xpose.msra.mxu0 0.0
    %716 = vmatprep.subr.mxu0 0.0
    %717 = vmatpush1.xpose.msra.mxu0 0.0
    %718 = vmatprep.subr.mxu0 0.0
    %719 = vmatpush1.xpose.msra.mxu0 0.0
    %720 = vmatprep.subr.mxu0 0.0
    %721 = vmatpush1.xpose.msra.mxu0 0.0
    %722 = vmatprep.subr.mxu0 0.0
    %723 = vmatpush1.xpose.msra.mxu0 0.0
    %724 = vmatprep.subr.mxu0 0.0
    %725 = vmatpush1.xpose.msra.mxu0 0.0
    %726 = vmatprep.subr.mxu0 0.0
    %727 = vmatpush1.xpose.msra.mxu0 0.0
    %728 = vmatprep.subr.mxu0 0.0
    %729 = vmatpush1.xpose.msra.mxu0 0.0
    %730 = vmatprep.mubr.f32.mxu0 %v56
    %731 = vmatmul.mubr.f32.gmra.mrb[0].mxu0 %v55
    %v732 = vpop.f32.mrb[0].mxu0
    %v733 = vadd.f32 %v663, %v732
    %v734 = vpop.f32.mrb[0].mxu0
    %735 = vdwg.mxu0
    %vm736 = vcmask 408576
    %737 = vst.msk [vmem:[#allocation7] sm:$0xff] %vm736, %v733
    // Predicated region
    $region22: #{tpu_custom_call.1} parent=1 // pred_check
      _
    $region23: #{tpu_custom_call.1} parent=1 // pred_check_branch
      %739 = sbr.rel (0) target = $region25
    $region24: #{tpu_custom_call.1} parent=1 // pred_region
      %s741 = ssub.s32 128, 128
      %742 = vsyncadd [#allocation4], %s741
      %s744 = sshll.u32 [#allocation7], 4
      %s745 = int_to_ptr.vmem [resolvable:$true] %s744
      %747 = dma.vmem_to_hbm [thread:$0]  %s745, 128, %s3, [#allocation4]
    $region25: #{tpu_custom_call.1} parent=1 // pred_fallthru
      _
    // Predicated region
    $region26: #{tpu_custom_call.1} parent=1 // pred_check
      _
    $region27: #{tpu_custom_call.1} parent=1 // pred_check_branch
      %749 = sbr.rel (0) target = $region29
    $region28: #{tpu_custom_call.1} parent=1 // pred_region
      %750 = dma.done [#allocation4], 128
    $region29: #{tpu_custom_call.1} parent=1 // pred_fallthru
      _
    %751 = vsyncpa [#allocation3], 1
    %752 = vsyncpa [#allocation6], 1
    %753 = vsyncpa [#allocation4], 1

</llo_original>
